<compile_context>
chip_gen: v7x
topology: tpu7x:2x2x1
jax: 0.10.0
libtpu: 0.0.40
codegen_flags: <defaults>
</compile_context>

<pallas_src>
import functools

import jax
import jax.numpy as jnp
from jax import lax
from jax.experimental import pallas as pl
from jax.experimental.pallas import tpu as pltpu

EPS = 1e-5


def _fused_kernel(p_ref, w_ref, g_ref, b_ref, o_ref, sum_ref, ssq_ref, *,
                  tm, m0, inv_count, eps):
    # p_ref : (4*Cin, tm)      patch tile for (parity p, pixel-tile t)     [VMEM]
    # w_ref : (4, Cout, 4*Cin) per-parity transposed weights (resident)    [VMEM]
    # g_ref, b_ref : (Cout, 1) batch-norm affine params (resident)         [VMEM]
    # o_ref : (Cout, 4*m0)     resident accumulator output (same block every step)
    # sum_ref / ssq_ref : (Cout, 1) f32 running per-channel sum / sum-of-squares
    p = pl.program_id(0)
    t = pl.program_id(1)
    first = (p == 0) & (t == 0)
    last = (p == pl.num_programs(0) - 1) & (t == pl.num_programs(1) - 1)

    @pl.when(first)
    def _():
        sum_ref[...] = jnp.zeros_like(sum_ref)
        ssq_ref[...] = jnp.zeros_like(ssq_ref)

    # (Cout, 4*Cin) @ (4*Cin, tm) -> (Cout, tm): f32 accumulation on the MXU,
    # pixel axis lane-dense.
    y = jnp.dot(w_ref[p], p_ref[...], preferred_element_type=jnp.float32)

    # Fused BatchNorm statistics: single pass, sum and sum-of-squares.
    sum_ref[...] += jnp.sum(y, axis=1, keepdims=True)
    ssq_ref[...] += jnp.sum(y * y, axis=1, keepdims=True)

    col0 = pl.multiple_of(p * m0 + t * tm, 128)
    o_ref[:, pl.ds(col0, tm)] = y

    @pl.when(last)
    def _():
        mean = sum_ref[...] * inv_count                   # (Cout, 1)
        var = ssq_ref[...] * inv_count - mean * mean      # biased var (PyTorch training)
        inv_std = lax.rsqrt(var + eps)
        scale = g_ref[...] * inv_std                      # fold gamma
        shift = b_ref[...] - mean * scale                 # fold beta
        o_ref[...] = jnp.maximum(o_ref[...] * scale + shift, 0.0)


def upper_module_forward(x_nchw, weight, gamma, beta):
    """Forward pass of Upper_module.

    x_nchw : (N, Cin, H, W) float32
    weight : (Cin, Cout, 4, 4) PyTorch ConvTranspose2d weight layout
    gamma, beta : (Cout,) BatchNorm2d affine parameters
    returns (N, Cout, 2H, 2W) float32
    """
    N, Cin, H, W = x_nchw.shape
    Cout = weight.shape[1]
    M0 = N * H * W                                     # pixels per parity group
    if M0 % 128 != 0:
        # TODO(synk): pad the pixel axis to a multiple of 128 and mask the padded
        # columns out of the batch-norm statistics for irregular shapes.
        raise ValueError("N*H*W must be a multiple of 128 for this kernel")

    # Largest lane-tile dividing the pixel axis (bigger tiles amortize the
    # ~0.35us/step grid overhead; everything here is far below the VMEM budget).
    tm = next(c for c in (2048, 1024, 512, 256, 128) if M0 % c == 0)

    # ---- glue (plain JAX): channel-first pad + polyphase patch build ----------
    x_cf = jnp.transpose(x_nchw, (1, 0, 2, 3))                 # (Cin, N, H, W)
    x_pad = jnp.pad(x_cf, ((0, 0), (0, 0), (1, 1), (1, 1)))    # (Cin, N, H+2, W+2)

    patch_groups, w_groups = [], []
    for py in range(2):
        for px in range(2):
            taps, wrows = [], []
            for dy in range(2):
                for dx in range(2):
                    taps.append(x_pad[:, :, py + dy:py + dy + H, px + dx:px + dx + W])
                    # output(2j+py, 2i+px) pulls kernel tap (kh, kw) = (3-py-2dy, 3-px-2dx)
                    wrows.append(weight[:, :, 3 - py - 2 * dy, 3 - px - 2 * dx])
            patch_groups.append(jnp.stack(taps, 0).reshape(4 * Cin, M0))
            w_groups.append(jnp.stack(wrows, 0).reshape(4 * Cin, Cout).T)
    patches = jnp.stack(patch_groups, 0)               # (4, 4*Cin, M0)
    w_t = jnp.stack(w_groups, 0)                       # (4, Cout, 4*Cin)
    # NOTE: cast `patches`/`w_t` to bfloat16 here for 2x MXU throughput on v6e/v7x
    # at realistic channel counts (kept f32 for exact parity with the f32 reference).

    kernel = functools.partial(_fused_kernel, tm=tm, m0=M0,
                               inv_count=1.0 / float(4 * M0), eps=EPS)

    out_flat = pl.pallas_call(
        kernel,
        out_shape=jax.ShapeDtypeStruct((Cout, 4 * M0), jnp.float32),
        grid=(4, M0 // tm),
        in_specs=[
            pl.BlockSpec((None, 4 * Cin, tm), lambda p, t: (p, 0, t)),
            pl.BlockSpec((4, Cout, 4 * Cin), lambda p, t: (0, 0, 0)),
            pl.BlockSpec((Cout, 1), lambda p, t: (0, 0)),
            pl.BlockSpec((Cout, 1), lambda p, t: (0, 0)),
        ],
        out_specs=pl.BlockSpec((Cout, 4 * M0), lambda p, t: (0, 0)),
        scratch_shapes=[pltpu.VMEM((Cout, 1), jnp.float32),
                        pltpu.VMEM((Cout, 1), jnp.float32)],
        compiler_params=pltpu.CompilerParams(
            # Both axes feed the shared resident output block + BN statistics.
            dimension_semantics=("arbitrary", "arbitrary"),
            vmem_limit_bytes=32 * 1024 * 1024),
    )(patches, w_t, gamma.reshape(Cout, 1), beta.reshape(Cout, 1))
    # TODO(synk): for activations larger than VMEM, split into a stats pass and a
    # (megacore-parallel) normalize+ReLU pass instead of keeping Y resident.

    # (Cout, py, px, N, H, W) -> NCHW, interleaving the parities back into the
    # even/odd output rows/columns.
    y6 = out_flat.reshape(Cout, 2, 2, N, H, W)
    return jnp.transpose(y6, (3, 0, 4, 1, 5, 2)).reshape(N, Cout, 2 * H, 2 * W)


def _reference(x_nchw, weight, gamma, beta):
    # Pure-JAX reference: ConvTranspose2d(4,2,1) as dilated conv + batchnorm + relu.
    w_conv = jnp.transpose(weight[:, :, ::-1, ::-1], (1, 0, 2, 3))  # (Cout, Cin, 4, 4)
    y = lax.conv_general_dilated(
        x_nchw, w_conv, window_strides=(1, 1), padding=[(2, 2), (2, 2)],
        lhs_dilation=(2, 2), dimension_numbers=("NCHW", "OIHW", "NCHW"))
    mean = jnp.mean(y, axis=(0, 2, 3), keepdims=True)
    var = jnp.mean((y - mean) ** 2, axis=(0, 2, 3), keepdims=True)
    y = (y - mean) * lax.rsqrt(var + EPS)
    y = y * gamma.reshape(1, -1, 1, 1) + beta.reshape(1, -1, 1, 1)
    return jnp.maximum(y, 0.0)


if __name__ == "__main__":
    key = jax.random.PRNGKey(0)
    N, Cin, Cout, H, W = 2, 4, 8, 16, 16

    k_x, k_w = jax.random.split(key)
    x = jax.random.normal(k_x, (N, Cin, H, W), dtype=jnp.float32)
    # ConvTranspose2d weight (Cin, Cout, 4, 4) ~ N(0, 0.02), no bias (init_layer).
    weight = 0.02 * jax.random.normal(k_w, (Cin, Cout, 4, 4), dtype=jnp.float32)
    gamma = jnp.ones((Cout,), jnp.float32)   # BatchNorm2d default affine init
    beta = jnp.zeros((Cout,), jnp.float32)

    fwd = jax.jit(upper_module_forward)
    out = jax.block_until_ready(fwd(x, weight, gamma, beta))

    ref = _reference(x, weight, gamma, beta)
    assert out.shape == (N, Cout, 2 * H, 2 * W), out.shape
    assert jnp.allclose(out, ref, atol=1e-3, rtol=1e-3), \
        float(jnp.max(jnp.abs(out - ref)))

    print("KERNEL_OK")
</pallas_src>

<mosaic_0001>
module attributes {stable_mosaic.version = 11 : i64} {
  func.func @_fused_kernel(%arg0: i32, %arg1: i32, %arg2: memref<1x16x512xf32, #tpu.memory_space<vmem>>, %arg3: memref<4x8x16xf32, #tpu.memory_space<vmem>>, %arg4: memref<8x1xf32, #tpu.memory_space<vmem>>, %arg5: memref<8x1xf32, #tpu.memory_space<vmem>>, %arg6: memref<8x2048xf32, #tpu.memory_space<vmem>>, %arg7: memref<8x1xf32, #tpu.memory_space<vmem>>, %arg8: memref<8x1xf32, #tpu.memory_space<vmem>>) attributes {dimension_semantics = [#tpu.dimension_semantics<arbitrary>, #tpu.dimension_semantics<arbitrary>], iteration_bounds = array<i64: 4, 1>, scalar_prefetch = 0 : i64, scratch_operands = 2 : i64, tpu.core_type = #tpu.core_type<tc>, window_params = [{transform_indices = @transform_0, window_bounds = array<i64: 1, 16, 512>}, {pipeline_mode = #tpu.pipeline_mode<synchronous>, transform_indices = @transform_1, window_bounds = array<i64: 4, 8, 16>}, {pipeline_mode = #tpu.pipeline_mode<synchronous>, transform_indices = @transform_2, window_bounds = array<i64: 8, 1>}, {pipeline_mode = #tpu.pipeline_mode<synchronous>, transform_indices = @transform_3, window_bounds = array<i64: 8, 1>}, {pipeline_mode = #tpu.pipeline_mode<synchronous>, transform_indices = @transform_4, window_bounds = array<i64: 8, 2048>}]} {
    %c0_i32 = arith.constant 0 : i32
    %0 = arith.cmpi eq, %arg0, %c0_i32 : i32
    %c0_i32_0 = arith.constant 0 : i32
    %1 = arith.cmpi eq, %arg1, %c0_i32_0 : i32
    %2 = arith.andi %0, %1 : i1
    %c3_i32 = arith.constant 3 : i32
    %3 = arith.cmpi eq, %arg0, %c3_i32 : i32
    %c0_i32_1 = arith.constant 0 : i32
    %4 = arith.cmpi eq, %arg1, %c0_i32_1 : i32
    %5 = arith.andi %3, %4 : i1
    %6 = arith.extui %2 : i1 to i32
    %c0_i32_2 = arith.constant 0 : i32
    %7 = arith.cmpi ne, %6, %c0_i32_2 : i32
    scf.if %7 {
      %cst_20 = arith.constant 0.000000e+00 : f32
      %33 = vector.broadcast %cst_20 : f32 to vector<8x1xf32>
      %c0_21 = arith.constant 0 : index
      %c0_22 = arith.constant 0 : index
      %34 = vector.load %arg7[%c0_21, %c0_22] : memref<8x1xf32, #tpu.memory_space<vmem>>, vector<8x1xf32>
      tpu.vector_store %arg7[%c0_21, %c0_22], %33 {strides = array<i32>} : memref<8x1xf32, #tpu.memory_space<vmem>>, vector<8x1xf32>,
      %cst_23 = arith.constant 0.000000e+00 : f32
      %35 = vector.broadcast %cst_23 : f32 to vector<8x1xf32>
      %c0_24 = arith.constant 0 : index
      %c0_25 = arith.constant 0 : index
      %36 = vector.load %arg8[%c0_24, %c0_25] : memref<8x1xf32, #tpu.memory_space<vmem>>, vector<8x1xf32>
      tpu.vector_store %arg8[%c0_24, %c0_25], %35 {strides = array<i32>} : memref<8x1xf32, #tpu.memory_space<vmem>>, vector<8x1xf32>,
    } else {
    }
    %8 = arith.index_cast %arg0 : i32 to index
    %c0 = arith.constant 0 : index
    %c0_3 = arith.constant 0 : index
    %9 = vector.load %arg3[%8, %c0, %c0_3] : memref<4x8x16xf32, #tpu.memory_space<vmem>>, vector<1x8x16xf32>
    %10 = vector.shape_cast %9 : vector<1x8x16xf32> to vector<8x16xf32>
    %c0_4 = arith.constant 0 : index
    %c0_5 = arith.constant 0 : index
    %c0_6 = arith.constant 0 : index
    %11 = vector.load %arg2[%c0_4, %c0_5, %c0_6] : memref<1x16x512xf32, #tpu.memory_space<vmem>>, vector<1x16x512xf32>
    %12 = vector.shape_cast %11 : vector<1x16x512xf32> to vector<16x512xf32>
    %cst = arith.constant dense<0.000000e+00> : vector<8x512xf32>
    %13 = tpu.matmul %10, %12, %cst {dimension_numbers = #tpu.dot_dimension_numbers<[1], [0], [0], [1], [0, 0, 1, 1], [], []>} : vector<8x16xf32>, vector<16x512xf32>, vector<8x512xf32> -> vector<8x512xf32>
    %c0_7 = arith.constant 0 : index
    %c0_8 = arith.constant 0 : index
    %14 = vector.load %arg7[%c0_7, %c0_8] : memref<8x1xf32, #tpu.memory_space<vmem>>, vector<8x1xf32>
    %cst_9 = arith.constant dense<0.000000e+00> : vector<8xf32>
    %15 = vector.multi_reduction <add>, %13, %cst_9 [1] : vector<8x512xf32> to vector<8xf32>
    %16 = vector.shape_cast %15 : vector<8xf32> to vector<8x1xf32>
    %17 = arith.addf %14, %16 : vector<8x1xf32>
    %c0_10 = arith.constant 0 : index
    %c0_11 = arith.constant 0 : index
    %18 = vector.load %arg7[%c0_10, %c0_11] : memref<8x1xf32, #tpu.memory_space<vmem>>, vector<8x1xf32>
    tpu.vector_store %arg7[%c0_10, %c0_11], %17 {strides = array<i32>} : memref<8x1xf32, #tpu.memory_space<vmem>>, vector<8x1xf32>,
    %c0_12 = arith.constant 0 : index
    %c0_13 = arith.constant 0 : index
    %19 = vector.load %arg8[%c0_12, %c0_13] : memref<8x1xf32, #tpu.memory_space<vmem>>, vector<8x1xf32>
    %20 = arith.mulf %13, %13 : vector<8x512xf32>
    %cst_14 = arith.constant dense<0.000000e+00> : vector<8xf32>
    %21 = vector.multi_reduction <add>, %20, %cst_14 [1] : vector<8x512xf32> to vector<8xf32>
    %22 = vector.shape_cast %21 : vector<8xf32> to vector<8x1xf32>
    %23 = arith.addf %19, %22 : vector<8x1xf32>
    %c0_15 = arith.constant 0 : index
    %c0_16 = arith.constant 0 : index
    %24 = vector.load %arg8[%c0_15, %c0_16] : memref<8x1xf32, #tpu.memory_space<vmem>>, vector<8x1xf32>
    tpu.vector_store %arg8[%c0_15, %c0_16], %23 {strides = array<i32>} : memref<8x1xf32, #tpu.memory_space<vmem>>, vector<8x1xf32>,
    %c512_i32 = arith.constant 512 : i32
    %25 = arith.muli %arg0, %c512_i32 : i32
    %c512_i32_17 = arith.constant 512 : i32
    %26 = arith.muli %arg1, %c512_i32_17 : i32
    %27 = arith.addi %25, %26 : i32
    %28 = tpu.assume_multiple %27, 128 : i32
    %c0_18 = arith.constant 0 : index
    %29 = arith.index_cast %28 : i32 to index
    %30 = vector.load %arg6[%c0_18, %29] : memref<8x2048xf32, #tpu.memory_space<vmem>>, vector<8x512xf32>
    tpu.vector_store %arg6[%c0_18, %29], %13 {strides = array<i32>} : memref<8x2048xf32, #tpu.memory_space<vmem>>, vector<8x512xf32>,
    %31 = arith.extui %5 : i1 to i32
    %c0_i32_19 = arith.constant 0 : i32
    %32 = arith.cmpi ne, %31, %c0_i32_19 : i32
    scf.if %32 {
      %c0_20 = arith.constant 0 : index
      %c0_21 = arith.constant 0 : index
      %33 = vector.load %arg7[%c0_20, %c0_21] : memref<8x1xf32, #tpu.memory_space<vmem>>, vector<8x1xf32>
      %cst_22 = arith.constant 4.8828125E-4 : f32
      %34 = vector.broadcast %cst_22 : f32 to vector<8x1xf32>
      %35 = arith.mulf %33, %34 : vector<8x1xf32>
      %c0_23 = arith.constant 0 : index
      %c0_24 = arith.constant 0 : index
      %36 = vector.load %arg8[%c0_23, %c0_24] : memref<8x1xf32, #tpu.memory_space<vmem>>, vector<8x1xf32>
      %cst_25 = arith.constant 4.8828125E-4 : f32
      %37 = vector.broadcast %cst_25 : f32 to vector<8x1xf32>
      %38 = arith.mulf %36, %37 : vector<8x1xf32>
      %39 = arith.mulf %35, %35 : vector<8x1xf32>
      %40 = arith.subf %38, %39 : vector<8x1xf32>
      %cst_26 = arith.constant 9.99999974E-6 : f32
      %41 = vector.broadcast %cst_26 : f32 to vector<8x1xf32>
      %42 = arith.addf %40, %41 : vector<8x1xf32>
      %43 = math.rsqrt %42 : vector<8x1xf32>
      %c0_27 = arith.constant 0 : index
      %c0_28 = arith.constant 0 : index
      %44 = vector.load %arg4[%c0_27, %c0_28] : memref<8x1xf32, #tpu.memory_space<vmem>>, vector<8x1xf32>
      %45 = arith.mulf %44, %43 : vector<8x1xf32>
      %c0_29 = arith.constant 0 : index
      %c0_30 = arith.constant 0 : index
      %46 = vector.load %arg5[%c0_29, %c0_30] : memref<8x1xf32, #tpu.memory_space<vmem>>, vector<8x1xf32>
      %47 = arith.mulf %35, %45 : vector<8x1xf32>
      %48 = arith.subf %46, %47 : vector<8x1xf32>
      %c0_31 = arith.constant 0 : index
      %c0_32 = arith.constant 0 : index
      %49 = vector.load %arg6[%c0_31, %c0_32] : memref<8x2048xf32, #tpu.memory_space<vmem>>, vector<8x2048xf32>
      %50 = vector.broadcast %45 : vector<8x1xf32> to vector<8x2048xf32>
      %51 = arith.mulf %49, %50 : vector<8x2048xf32>
      %52 = vector.broadcast %48 : vector<8x1xf32> to vector<8x2048xf32>
      %53 = arith.addf %51, %52 : vector<8x2048xf32>
      %cst_33 = arith.constant 0.000000e+00 : f32
      %54 = vector.broadcast %cst_33 : f32 to vector<8x2048xf32>
      %55 = arith.maximumf %53, %54 : vector<8x2048xf32>
      %c0_34 = arith.constant 0 : index
      %c0_35 = arith.constant 0 : index
      %56 = vector.load %arg6[%c0_34, %c0_35] : memref<8x2048xf32, #tpu.memory_space<vmem>>, vector<8x2048xf32>
      tpu.vector_store %arg6[%c0_34, %c0_35], %55 {strides = array<i32>} : memref<8x2048xf32, #tpu.memory_space<vmem>>, vector<8x2048xf32>,
    } else {
    }
    return
  }
  func.func @transform_0(%arg0: i32, %arg1: i32) -> (i32, i32, i32) {
    %c0_i32 = arith.constant 0 : i32
    %c0_i32_0 = arith.constant 0 : i32
    return %arg0, %c0_i32, %arg1 : i32, i32, i32
  }
  func.func @transform_1(%arg0: i32, %arg1: i32) -> (i32, i32, i32) {
    %c0_i32 = arith.constant 0 : i32
    %c0_i32_0 = arith.constant 0 : i32
    %c0_i32_1 = arith.constant 0 : i32
    %c0_i32_2 = arith.constant 0 : i32
    return %c0_i32, %c0_i32_0, %c0_i32_1 : i32, i32, i32
  }
  func.func @transform_2(%arg0: i32, %arg1: i32) -> (i32, i32) {
    %c0_i32 = arith.constant 0 : i32
    %c0_i32_0 = arith.constant 0 : i32
    %c0_i32_1 = arith.constant 0 : i32
    return %c0_i32, %c0_i32_0 : i32, i32
  }
  func.func @transform_3(%arg0: i32, %arg1: i32) -> (i32, i32) {
    %c0_i32 = arith.constant 0 : i32
    %c0_i32_0 = arith.constant 0 : i32
    %c0_i32_1 = arith.constant 0 : i32
    return %c0_i32, %c0_i32_0 : i32, i32
  }
  func.func @transform_4(%arg0: i32, %arg1: i32) -> (i32, i32) {
    %c0_i32 = arith.constant 0 : i32
    %c0_i32_0 = arith.constant 0 : i32
    %c0_i32_1 = arith.constant 0 : i32
    return %c0_i32, %c0_i32_0 : i32, i32
  }
}

</mosaic_0001>

<llo_original>
// kernel: upper_module_forward.1
$region0: #{upper_module_forward.1}
  #allocation0 [shape = 'u32[]', space=smem, size = 0x4, offset = 0x4, fixed_abs, tag = 'smem constant byte address 0x4 - core index']
  #allocation1 [shape = 'u32[144,128]{1,0:T(1,128)}', space=vmem, size = 0x12000, scoped, tag = 'internal scratch']
  #allocation2 [shape = 'f32[8,1]{1,0:T(8,128)}', space=vmem, size = 0x1000, scoped, tag = 'scratch operand']
  #allocation3 [shape = 'f32[8,1]{1,0:T(8,128)}', space=vmem, size = 0x1000, scoped, tag = 'scratch operand']
  %s0 = inlined_call_operand.vmem [shape: f32[4,16,512], index: 0, kind: input, shape index: {}]
  %s1 = inlined_call_operand.vmem [shape: f32[4,8,16], index: 1, kind: input, shape index: {}]
  %s2 = inlined_call_operand.vmem [shape: f32[8,1], index: 2, kind: input, shape index: {}]
  %s3 = inlined_call_operand.vmem [shape: f32[8,1], index: 3, kind: input, shape index: {}]
  %s4 = inlined_call_operand.vmem [shape: f32[8,2048], index: 4, kind: output, shape index: {}]
  %s5 = sld [smem:[#allocation0]]
  $region57: #{upper_module_forward.1} parent=0
    _
  %s7 = ssub.s32 1, %s5
  %s8 = scalar_select 0, %s7, %s5
  loop: start=0, step=1, limit=6
  $region2: #{upper_module_forward.1} parent=0 // loop_pre_header
    _
  $region3: #{upper_module_forward.1} parent=0 // loop_header
    %s10 = sphi 0, %s14
    %p11 = scmp.ge.s32.totalorder %s10, 6
    %s17 = sphi 0, %s29
    %s18 = sphi 0, %s25
    %s19 = sphi 0, %s17
    %s20 = sphi 0, %s18
    %s21 = sphi 0, %s19
    %s22 = sphi 0, %s20
    %s34 = sphi 0, %s36
    %s37 = sphi 0, %s34
    %s38 = sphi 0, %s37
    %s54 = sphi 0, %s38
    %s58 = sphi 0, %s58
    %s60 = sphi 0, %s58
    %s61 = sphi 0, %s60
    %s75 = sphi 0, %s61
    %s79 = sphi 0, %s79
    %s81 = sphi 0, %s79
    %s82 = sphi 0, %s81
    %s96 = sphi 0, %s82
    %s100 = sphi 0, %s100
    %s102 = sphi 0, %s100
    %s103 = sphi 0, %s102
    %s117 = sphi 0, %s103
    %s121 = sphi 0, %s121
    %s123 = sphi 0, %s121
    %s124 = sphi 0, %s123
    %s138 = sphi 0, %s124
  $region4: #{upper_module_forward.1} parent=0 // loop_header_branch
    %13 = sbr.rel (%p11) target = $region8
  $region5: #{upper_module_forward.1} parent=0 // loop_body
    %s15 = ssub.s32 %s10, 1
    %s16 = ssub.s32 %s10, 2
    %s23 = sadd.s32 1, %s18
    %p24 = scmp.ge.s32.totalorder %s23, 1
    %s25 = scalar_select %p24, 0, %s23
    %s26 = sadd.s32 1, %s17
    %s27 = scalar_select %p24, %s26, %s17
    %p28 = scmp.ge.s32.totalorder %s27, 4
    %s29 = scalar_select %p28, 0, %s27
    %s30 = ssub.s32 %s17, %s29
    %s31 = ssub.s32 %s18, %s25
    %s32 = sor.u32 %s30, %s31
    %p33 = scmp.eq.s32.totalorder %s32, 0
    %s35 = sadd.s32 %s34, 1
    %s36 = scalar_select %p33, %s34, %s35
    %p39 = pneg %p33
    %p40 = scmp.eq.s32.totalorder %s10, 3
    %p41 = por %p39, %p40
    %p42 = scmp.ne.s32.totalorder %s34, %s37
    %p43 = scmp.eq.s32.totalorder %s10, 0
    %p44 = por %p42, %p43
    %p45 = scmp.ne.s32.totalorder %s34, %s37
    %p46 = scmp.eq.s32.totalorder %s15, 3
    %p47 = por %p45, %p46
    %p48 = scmp.ne.s32.totalorder %s37, %s38
    %p49 = scmp.eq.s32.totalorder %s15, 0
    %p50 = por %p48, %p49
    %p51 = scmp.ne.s32.totalorder %s37, %s38
    %p52 = scmp.eq.s32.totalorder %s16, 3
    %p53 = por %p51, %p52
    %p55 = scmp.ne.s32.totalorder %s38, %s54
    %p56 = scmp.eq.s32.totalorder %s16, 0
    %p57 = por %p55, %p56
    %s59 = sadd.s32 %s58, 1
    %p62 = scmp.eq.s32.totalorder %s10, 3
    %p63 = scmp.ne.s32.totalorder %s58, %s60
    %p64 = scmp.eq.s32.totalorder %s10, 0
    %p65 = por %p63, %p64
    %p66 = scmp.ne.s32.totalorder %s58, %s60
    %p67 = scmp.eq.s32.totalorder %s15, 3
    %p68 = por %p66, %p67
    %p69 = scmp.ne.s32.totalorder %s60, %s61
    %p70 = scmp.eq.s32.totalorder %s15, 0
    %p71 = por %p69, %p70
    %p72 = scmp.ne.s32.totalorder %s60, %s61
    %p73 = scmp.eq.s32.totalorder %s16, 3
    %p74 = por %p72, %p73
    %p76 = scmp.ne.s32.totalorder %s61, %s75
    %p77 = scmp.eq.s32.totalorder %s16, 0
    %p78 = por %p76, %p77
    %s80 = sadd.s32 %s79, 1
    %p83 = scmp.eq.s32.totalorder %s10, 3
    %p84 = scmp.ne.s32.totalorder %s79, %s81
    %p85 = scmp.eq.s32.totalorder %s10, 0
    %p86 = por %p84, %p85
    %p87 = scmp.ne.s32.totalorder %s79, %s81
    %p88 = scmp.eq.s32.totalorder %s15, 3
    %p89 = por %p87, %p88
    %p90 = scmp.ne.s32.totalorder %s81, %s82
    %p91 = scmp.eq.s32.totalorder %s15, 0
    %p92 = por %p90, %p91
    %p93 = scmp.ne.s32.totalorder %s81, %s82
    %p94 = scmp.eq.s32.totalorder %s16, 3
    %p95 = por %p93, %p94
    %p97 = scmp.ne.s32.totalorder %s82, %s96
    %p98 = scmp.eq.s32.totalorder %s16, 0
    %p99 = por %p97, %p98
    %s101 = sadd.s32 %s100, 1
    %p104 = scmp.eq.s32.totalorder %s10, 3
    %p105 = scmp.ne.s32.totalorder %s100, %s102
    %p106 = scmp.eq.s32.totalorder %s10, 0
    %p107 = por %p105, %p106
    %p108 = scmp.ne.s32.totalorder %s100, %s102
    %p109 = scmp.eq.s32.totalorder %s15, 3
    %p110 = por %p108, %p109
    %p111 = scmp.ne.s32.totalorder %s102, %s103
    %p112 = scmp.eq.s32.totalorder %s15, 0
    %p113 = por %p111, %p112
    %p114 = scmp.ne.s32.totalorder %s102, %s103
    %p115 = scmp.eq.s32.totalorder %s16, 3
    %p116 = por %p114, %p115
    %p118 = scmp.ne.s32.totalorder %s103, %s117
    %p119 = scmp.eq.s32.totalorder %s16, 0
    %p120 = por %p118, %p119
    %s122 = sadd.s32 %s121, 1
    %p125 = scmp.eq.s32.totalorder %s10, 3
    %p126 = scmp.ne.s32.totalorder %s121, %s123
    %p127 = scmp.eq.s32.totalorder %s10, 0
    %p128 = por %p126, %p127
    %p129 = scmp.ne.s32.totalorder %s121, %s123
    %p130 = scmp.eq.s32.totalorder %s15, 3
    %p131 = por %p129, %p130
    %p132 = scmp.ne.s32.totalorder %s123, %s124
    %p133 = scmp.eq.s32.totalorder %s15, 0
    %p134 = por %p132, %p133
    %p135 = scmp.ne.s32.totalorder %s123, %s124
    %p136 = scmp.eq.s32.totalorder %s16, 3
    %p137 = por %p135, %p136
    %p139 = scmp.ne.s32.totalorder %s124, %s138
    %p140 = scmp.eq.s32.totalorder %s16, 0
    %p141 = por %p139, %p140
    %p142 = scmp.le.s32.totalorder 1, %s10
    %p143 = scmp.lt.s32.totalorder %s10, 5
    %p144 = pnand %p142, %p143
    %p145 = pneg %p144
    // Predicated region
    $region9: #{upper_module_forward.1} parent=5 // pred_check
      _
    $region10: #{upper_module_forward.1} parent=5 // pred_check_branch
      %147 = sbr.rel (%p144) target = $region12
    $region11: #{upper_module_forward.1} parent=5 // pred_region
      %s148 = ssub.s32 %s10, 1
      // Predicated region
      $region13: #{upper_module_forward.1} parent=11 // pred_check
        %p149 = pneg %p71
      $region14: #{upper_module_forward.1} parent=11 // pred_check_branch
        %151 = sbr.rel (%p149) target = $region16
      $region15: #{upper_module_forward.1} parent=11 // pred_region
        _
      $region16: #{upper_module_forward.1} parent=11 // pred_fallthru
        _
      // Predicated region
      $region17: #{upper_module_forward.1} parent=11 // pred_check
        %p152 = pneg %p92
      $region18: #{upper_module_forward.1} parent=11 // pred_check_branch
        %154 = sbr.rel (%p152) target = $region20
      $region19: #{upper_module_forward.1} parent=11 // pred_region
        _
      $region20: #{upper_module_forward.1} parent=11 // pred_fallthru
        _
      // Predicated region
      $region21: #{upper_module_forward.1} parent=11 // pred_check
        %p155 = pneg %p113
      $region22: #{upper_module_forward.1} parent=11 // pred_check_branch
        %157 = sbr.rel (%p155) target = $region24
      $region23: #{upper_module_forward.1} parent=11 // pred_region
        _
      $region24: #{upper_module_forward.1} parent=11 // pred_fallthru
        _
    $region12: #{upper_module_forward.1} parent=5 // pred_fallthru
      _
    %p158 = scmp.lt.s32.totalorder %s10, 4
    // Predicated region
    $region25: #{upper_module_forward.1} parent=5 // pred_check
      %p159 = pneg %p158
    $region26: #{upper_module_forward.1} parent=5 // pred_check_branch
      %161 = sbr.rel (%p159) target = $region28
    $region27: #{upper_module_forward.1} parent=5 // pred_region
      // Predicated region
      $region29: #{upper_module_forward.1} parent=27 // pred_check
        %p162 = pneg %p44
      $region30: #{upper_module_forward.1} parent=27 // pred_check_branch
        %164 = sbr.rel (%p162) target = $region32
      $region31: #{upper_module_forward.1} parent=27 // pred_region
        %s165 = smul.u32 4, %s18
        %p166 = scmp.lt.s32.totalorder %s17, 3
        %s167 = scalar_select %p166, %s17, 3
        %p168 = scmp.lt.s32.totalorder %s165, 3
        %s169 = scalar_select %p168, %s165, 3
        %s170 = smul.addr %s167, 8
        %s171 = sadd.s32 %s169, %s170
        %s172 = smul.addr %s171, 8
        %s173 = scalar_lea.vmem %s0, %s172
        %s174 = smul.u32 4, %s18
      $region32: #{upper_module_forward.1} parent=27 // pred_fallthru
        _
    $region28: #{upper_module_forward.1} parent=5 // pred_fallthru
      _
    %p175 = scmp.le.s32.totalorder 1, %s10
    %p176 = scmp.lt.s32.totalorder %s10, 5
    %p177 = pnand %p175, %p176
    %p178 = pneg %p177
    // Predicated region
    $region33: #{upper_module_forward.1} parent=5 // pred_check
      _
    $region34: #{upper_module_forward.1} parent=5 // pred_check_branch
      %180 = sbr.rel (%p177) target = $region36
    $region35: #{upper_module_forward.1} parent=5 // pred_region
      %s181 = ssub.s32 %s10, 1
      %s182 = smul.u32 4, %s20
      %p183 = scmp.lt.s32.totalorder %s19, 3
      %s184 = scalar_select %p183, %s19, 3
      %p185 = scmp.lt.s32.totalorder %s182, 3
      %s186 = scalar_select %p185, %s182, 3
      %s187 = smul.addr %s184, 8
      %s188 = sadd.s32 %s186, %s187
      %s189 = smul.addr %s188, 8
      %s190 = scalar_lea.vmem %s0, %s189
      %p191 = pneg %p50
      %p192 = pneg %p47
      %p193 = pneg %p71
      %p194 = pneg %p68
      %p195 = pneg %p92
      %p196 = pneg %p89
      %p197 = pneg %p113
      %p198 = pneg %p110
      %p199 = pneg %p134
      %p200 = pneg %p131
      %s201 = smul.u32 4, %s20
      %p202 = scmp.lt.s32.totalorder %s19, 3
      %s203 = scalar_select %p202, %s19, 3
      %p204 = scmp.lt.s32.totalorder %s201, 3
      %s205 = scalar_select %p204, %s201, 3
      %s206 = smul.addr %s203, 8
      %s207 = sadd.s32 %s205, %s206
      %s208 = smul.addr %s207, 8
      %s209 = scalar_lea.vmem %s0, %s208
      %s210 = smul.u32 4, %s20
      %p211 = scmp.eq.s32.totalorder %s19, 0
      %p212 = scmp.eq.s32.totalorder %s20, 0
      %p213 = pnand %p211, %p212
      %p214 = pneg %p213
      %p215 = scmp.eq.s32.totalorder %s19, 3
      %p216 = pnand %p215, %p212
      %p217 = pneg %p216
      // Predicated region
      $region37: #{upper_module_forward.1} parent=35 // pred_check
        _
      $region38: #{upper_module_forward.1} parent=35 // pred_check_branch
        %219 = sbr.rel (%p213) target = $region40
      $region39: #{upper_module_forward.1} parent=35 // pred_region
        %vm220 = vcmask 7168
        %221 = vst.msk [vmem:[#allocation2] sm:$0xff] %vm220, 0.0
        %222 = vst.msk [vmem:[#allocation3] sm:$0xff] %vm220, 0.0
      $region40: #{upper_module_forward.1} parent=35 // pred_fallthru
        _
      %s223 = smul.u32 %s19, 8
      %s224 = scalar_lea.vmem %s1, %s223
      %v225 = vld [vmem:[%s224] sm:$0xff]
      %v226 = vld [vmem:[%s209] sm:$0xff]
      %v227 = vld [vmem:[%s209 + $0x8] sm:$0xff]
      %v228 = vld [vmem:[%s209 + $0x10] sm:$0xff]
      %v229 = vld [vmem:[%s209 + $0x18] sm:$0xff]
      %v230 = vld [vmem:[%s209 + $0x20] sm:$0xff]
      %v231 = vld [vmem:[%s209 + $0x28] sm:$0xff]
      %v232 = vld [vmem:[%s209 + $0x30] sm:$0xff]
      %v233 = vld [vmem:[%s209 + $0x38] sm:$0xff]
      %vm234 = vcmask 130048
      %v236 = vsel %vm234, %v225, 0
      %238 = vmatprep.subr.mxu0 %v227
      %239 = vmatpush1.msra.mxu0 %v226
      %240 = vmatprep.subr.mxu0 %v231
      %241 = vmatpush1.msra.mxu0 %v230
      %242 = vmatprep.subr.mxu0 0.0
      %243 = vmatpush1.msra.mxu0 0.0
      %244 = vmatprep.subr.mxu0 0.0
      %245 = vmatpush1.msra.mxu0 0.0
      %246 = vmatprep.subr.mxu0 0.0
      %247 = vmatpush1.msra.mxu0 0.0
      %248 = vmatprep.subr.mxu0 0.0
      %249 = vmatpush1.msra.mxu0 0.0
      %250 = vmatprep.subr.mxu0 0.0
      %251 = vmatpush1.msra.mxu0 0.0
      %252 = vmatprep.subr.mxu0 0.0
      %253 = vmatpush1.msra.mxu0 0.0
      %254 = vmatprep.subr.mxu0 0.0
      %255 = vmatpush1.msra.mxu0 0.0
      %256 = vmatprep.subr.mxu0 0.0
      %257 = vmatpush1.msra.mxu0 0.0
      %258 = vmatprep.subr.mxu0 0.0
      %259 = vmatpush1.msra.mxu0 0.0
      %260 = vmatprep.subr.mxu0 0.0
      %261 = vmatpush1.msra.mxu0 0.0
      %262 = vmatprep.subr.mxu0 0.0
      %263 = vmatpush1.msra.mxu0 0.0
      %264 = vmatprep.subr.mxu0 0.0
      %265 = vmatpush1.msra.mxu0 0.0
      %266 = vmatprep.subr.mxu0 0.0
      %267 = vmatpush1.msra.mxu0 0.0
      %268 = vmatprep.subr.mxu0 0.0
      %269 = vmatpush1.msra.mxu0 0.0
      %270 = vmatprep.subr.mxu0 0.0
      %271 = vmatpush1.msra.mxu0 0.0
      %272 = vmatprep.subr.mxu0 0.0
      %273 = vmatpush1.msra.mxu0 0.0
      %274 = vmatprep.subr.mxu0 0.0
      %275 = vmatpush1.msra.mxu0 0.0
      %276 = vmatprep.subr.mxu0 0.0
      %277 = vmatpush1.msra.mxu0 0.0
      %278 = vmatprep.subr.mxu0 0.0
      %279 = vmatpush1.msra.mxu0 0.0
      %280 = vmatprep.subr.mxu0 0.0
      %281 = vmatpush1.msra.mxu0 0.0
      %282 = vmatprep.subr.mxu0 0.0
      %283 = vmatpush1.msra.mxu0 0.0
      %284 = vmatprep.subr.mxu0 0.0
      %285 = vmatpush1.msra.mxu0 0.0
      %286 = vmatprep.subr.mxu0 0.0
      %287 = vmatpush1.msra.mxu0 0.0
      %288 = vmatprep.subr.mxu0 0.0
      %289 = vmatpush1.msra.mxu0 0.0
      %290 = vmatprep.subr.mxu0 0.0
      %291 = vmatpush1.msra.mxu0 0.0
      %292 = vmatprep.subr.mxu0 0.0
      %293 = vmatpush1.msra.mxu0 0.0
      %294 = vmatprep.subr.mxu0 0.0
      %295 = vmatpush1.msra.mxu0 0.0
      %296 = vmatprep.subr.mxu0 0.0
      %297 = vmatpush1.msra.mxu0 0.0
      %298 = vmatprep.subr.mxu0 0.0
      %299 = vmatpush1.msra.mxu0 0.0
      %300 = vmatprep.subr.mxu0 0.0
      %301 = vmatpush1.msra.mxu0 0.0
      %302 = vmatprep.mubr.f32.mxu0 0.0
      %303 = vmatmul.mubr.f32.gmra.mrb[0].mxu0 %v236
      %v304 = vpop.f32.mrb[0].mxu0
      %v305 = vadd.f32 0.0, %v304
      %v306 = vpop.f32.mrb[0].mxu0
      %v307 = vadd.f32 0.0, %v306
      %308 = vdwg.mxu0
      %309 = vmatprep.subr.mxu0 %v229
      %310 = vmatpush1.msra.mxu0 %v228
      %311 = vmatprep.subr.mxu0 %v233
      %312 = vmatpush1.msra.mxu0 %v232
      %313 = vmatprep.subr.mxu0 0.0
      %314 = vmatpush1.msra.mxu0 0.0
      %315 = vmatprep.subr.mxu0 0.0
      %316 = vmatpush1.msra.mxu0 0.0
      %317 = vmatprep.subr.mxu0 0.0
      %318 = vmatpush1.msra.mxu0 0.0
      %319 = vmatprep.subr.mxu0 0.0
      %320 = vmatpush1.msra.mxu0 0.0
      %321 = vmatprep.subr.mxu0 0.0
      %322 = vmatpush1.msra.mxu0 0.0
      %323 = vmatprep.subr.mxu0 0.0
      %324 = vmatpush1.msra.mxu0 0.0
      %325 = vmatprep.subr.mxu0 0.0
      %326 = vmatpush1.msra.mxu0 0.0
      %327 = vmatprep.subr.mxu0 0.0
      %328 = vmatpush1.msra.mxu0 0.0
      %329 = vmatprep.subr.mxu0 0.0
      %330 = vmatpush1.msra.mxu0 0.0
      %331 = vmatprep.subr.mxu0 0.0
      %332 = vmatpush1.msra.mxu0 0.0
      %333 = vmatprep.subr.mxu0 0.0
      %334 = vmatpush1.msra.mxu0 0.0
      %335 = vmatprep.subr.mxu0 0.0
      %336 = vmatpush1.msra.mxu0 0.0
      %337 = vmatprep.subr.mxu0 0.0
      %338 = vmatpush1.msra.mxu0 0.0
      %339 = vmatprep.subr.mxu0 0.0
      %340 = vmatpush1.msra.mxu0 0.0
      %341 = vmatprep.subr.mxu0 0.0
      %342 = vmatpush1.msra.mxu0 0.0
      %343 = vmatprep.subr.mxu0 0.0
      %344 = vmatpush1.msra.mxu0 0.0
      %345 = vmatprep.subr.mxu0 0.0
      %346 = vmatpush1.msra.mxu0 0.0
      %347 = vmatprep.subr.mxu0 0.0
      %348 = vmatpush1.msra.mxu0 0.0
      %349 = vmatprep.subr.mxu0 0.0
      %350 = vmatpush1.msra.mxu0 0.0
      %351 = vmatprep.subr.mxu0 0.0
      %352 = vmatpush1.msra.mxu0 0.0
      %353 = vmatprep.subr.mxu0 0.0
      %354 = vmatpush1.msra.mxu0 0.0
      %355 = vmatprep.subr.mxu0 0.0
      %356 = vmatpush1.msra.mxu0 0.0
      %357 = vmatprep.subr.mxu0 0.0
      %358 = vmatpush1.msra.mxu0 0.0
      %359 = vmatprep.subr.mxu0 0.0
      %360 = vmatpush1.msra.mxu0 0.0
      %361 = vmatprep.subr.mxu0 0.0
      %362 = vmatpush1.msra.mxu0 0.0
      %363 = vmatprep.subr.mxu0 0.0
      %364 = vmatpush1.msra.mxu0 0.0
      %365 = vmatprep.subr.mxu0 0.0
      %366 = vmatpush1.msra.mxu0 0.0
      %367 = vmatprep.subr.mxu0 0.0
      %368 = vmatpush1.msra.mxu0 0.0
      %369 = vmatprep.subr.mxu0 0.0
      %370 = vmatpush1.msra.mxu0 0.0
      %371 = vmatprep.subr.mxu0 0.0
      %372 = vmatpush1.msra.mxu0 0.0
      %373 = vmatprep.mubr.f32.mxu0 0.0
      %374 = vmatmul.mubr.f32.gmra.mrb[0].mxu0 %v236
      %v375 = vpop.f32.mrb[0].mxu0
      %v376 = vadd.f32 0.0, %v375
      %v377 = vpop.f32.mrb[0].mxu0
      %v378 = vadd.f32 0.0, %v377
      %379 = vdwg.mxu0
      %v380 = vld [vmem:[#allocation2] sm:$0xff]
      %v381 = vadd.f32 %v305, %v307
      %v382 = vadd.f32 %v381, %v376
      %v383 = vadd.f32 %v382, %v378
      %384 = vadd.xlane.f32.xlu0 %v383
      %v385 = vpop.xlane.xlu0 %384
      %v386 = vadd.f32 %v380, %v385
      %vm387 = vcmask 7168
      %388 = vst.msk [vmem:[#allocation2] sm:$0xff] %vm387, %v386
      %v389 = vld [vmem:[#allocation3] sm:$0xff]
      %v390 = vmul.f32 %v305, %v305
      %v391 = vmul.f32 %v307, %v307
      %v392 = vmul.f32 %v376, %v376
      %v393 = vmul.f32 %v378, %v378
      %v394 = vadd.f32 %v390, %v391
      %v395 = vadd.f32 %v394, %v392
      %v396 = vadd.f32 %v395, %v393
      %397 = vadd.xlane.f32.xlu0 %v396
      %v398 = vpop.xlane.xlu0 %397
      %v399 = vadd.f32 %v389, %v398
      %400 = vst.msk [vmem:[#allocation3] sm:$0xff] %vm387, %v399
      %s401 = smul.u32 %s19, 512
      %s402 = smul.u32 %s20, 512
      %s403 = sadd.s32 %s401, %s402
      %s404 = sshra.s32 %s403, 7
      %s405 = sand.u32 %s403, 127
      %s406 = smul.addr %s404, 8
      %s407 = scalar_lea.vmem %s4, %s406
      %408 = vst [vmem:[%s407] sm:$0xff] %v305
      %409 = vst [vmem:[%s407 + $0x8] sm:$0xff] %v307
      %410 = vst [vmem:[%s407 + $0x10] sm:$0xff] %v376
      %411 = vst [vmem:[%s407 + $0x18] sm:$0xff] %v378
      // Predicated region
      $region41: #{upper_module_forward.1} parent=35 // pred_check
        _
      $region42: #{upper_module_forward.1} parent=35 // pred_check_branch
        %413 = sbr.rel (%p216) target = $region44
      $region43: #{upper_module_forward.1} parent=35 // pred_region
        %v414 = vld [vmem:[#allocation2] sm:$0xff]
        %v415 = vmul.f32 %v414, 0.00048828125
        %v416 = vld [vmem:[#allocation3] sm:$0xff]
        %v417 = vmul.f32 %v416, 0.00048828125
        %v418 = vmul.f32 %v415, %v415
        %v419 = vsub.f32 %v417, %v418
        %v420 = vadd.f32 %v419, 1e-05
        %v421 = vrsqrt.pop %v420
        %v422 = vld [vmem:[%s2] sm:$0xff]
        %v423 = vmul.f32 %v422, %v421
        %v424 = vld [vmem:[%s3] sm:$0xff]
        %v425 = vmul.f32 %v415, %v423
        %v426 = vsub.f32 %v424, %v425
        %v427 = vld [vmem:[%s4] sm:$0xff]
        %v428 = vld [vmem:[%s4 + $0x8] sm:$0xff]
        %v429 = vld [vmem:[%s4 + $0x10] sm:$0xff]
        %v430 = vld [vmem:[%s4 + $0x18] sm:$0xff]
        %v431 = vld [vmem:[%s4 + $0x20] sm:$0xff]
        %v432 = vld [vmem:[%s4 + $0x28] sm:$0xff]
        %v433 = vld [vmem:[%s4 + $0x30] sm:$0xff]
        %v434 = vld [vmem:[%s4 + $0x38] sm:$0xff]
        %v435 = vld [vmem:[%s4 + $0x40] sm:$0xff]
        %v436 = vld [vmem:[%s4 + $0x48] sm:$0xff]
        %v437 = vld [vmem:[%s4 + $0x50] sm:$0xff]
        %v438 = vld [vmem:[%s4 + $0x58] sm:$0xff]
        %v439 = vld [vmem:[%s4 + $0x60] sm:$0xff]
        %v440 = vld [vmem:[%s4 + $0x68] sm:$0xff]
        %v441 = vld [vmem:[%s4 + $0x70] sm:$0xff]
        %v442 = vld [vmem:[%s4 + $0x78] sm:$0xff]
        %444 = vset.pattern.permute.xlu0 0
        %445 = vperm.xlu0 %444, %v423
        %v446 = vpop.permute.xlu0 %445
        %v448 = vmul.f32 %v427, %v446
        %v449 = vmul.f32 %v428, %v446
        %v450 = vmul.f32 %v429, %v446
        %v451 = vmul.f32 %v430, %v446
        %v452 = vmul.f32 %v431, %v446
        %v453 = vmul.f32 %v432, %v446
        %v454 = vmul.f32 %v433, %v446
        %v455 = vmul.f32 %v434, %v446
        %v456 = vmul.f32 %v435, %v446
        %v457 = vmul.f32 %v436, %v446
        %v458 = vmul.f32 %v437, %v446
        %v459 = vmul.f32 %v438, %v446
        %v460 = vmul.f32 %v439, %v446
        %v461 = vmul.f32 %v440, %v446
        %v462 = vmul.f32 %v441, %v446
        %v463 = vmul.f32 %v442, %v446
        %465 = vset.pattern.permute.xlu0 0
        %466 = vperm.xlu0 %465, %v426
        %v467 = vpop.permute.xlu0 %466
        %v469 = vadd.f32 %v448, %v467
        %v470 = vadd.f32 %v449, %v467
        %v471 = vadd.f32 %v450, %v467
        %v472 = vadd.f32 %v451, %v467
        %v473 = vadd.f32 %v452, %v467
        %v474 = vadd.f32 %v453, %v467
        %v475 = vadd.f32 %v454, %v467
        %v476 = vadd.f32 %v455, %v467
        %v477 = vadd.f32 %v456, %v467
        %v478 = vadd.f32 %v457, %v467
        %v479 = vadd.f32 %v458, %v467
        %v480 = vadd.f32 %v459, %v467
        %v481 = vadd.f32 %v460, %v467
        %v482 = vadd.f32 %v461, %v467
        %v483 = vadd.f32 %v462, %v467
        %v484 = vadd.f32 %v463, %v467
        %v485 = vmax.f32 %v469, 0.0
        %v486 = vmax.f32 %v470, 0.0
        %v487 = vmax.f32 %v471, 0.0
        %v488 = vmax.f32 %v472, 0.0
        %v489 = vmax.f32 %v473, 0.0
        %v490 = vmax.f32 %v474, 0.0
        %v491 = vmax.f32 %v475, 0.0
        %v492 = vmax.f32 %v476, 0.0
        %v493 = vmax.f32 %v477, 0.0
        %v494 = vmax.f32 %v478, 0.0
        %v495 = vmax.f32 %v479, 0.0
        %v496 = vmax.f32 %v480, 0.0
        %v497 = vmax.f32 %v481, 0.0
        %v498 = vmax.f32 %v482, 0.0
        %v499 = vmax.f32 %v483, 0.0
        %v500 = vmax.f32 %v484, 0.0
        %501 = vst [vmem:[%s4] sm:$0xff] %v485
        %502 = vst [vmem:[%s4 + $0x8] sm:$0xff] %v486
        %503 = vst [vmem:[%s4 + $0x10] sm:$0xff] %v487
        %504 = vst [vmem:[%s4 + $0x18] sm:$0xff] %v488
        %505 = vst [vmem:[%s4 + $0x20] sm:$0xff] %v489
        %506 = vst [vmem:[%s4 + $0x28] sm:$0xff] %v490
        %507 = vst [vmem:[%s4 + $0x30] sm:$0xff] %v491
        %508 = vst [vmem:[%s4 + $0x38] sm:$0xff] %v492
        %509 = vst [vmem:[%s4 + $0x40] sm:$0xff] %v493
        %510 = vst [vmem:[%s4 + $0x48] sm:$0xff] %v494
        %511 = vst [vmem:[%s4 + $0x50] sm:$0xff] %v495
        %512 = vst [vmem:[%s4 + $0x58] sm:$0xff] %v496
        %513 = vst [vmem:[%s4 + $0x60] sm:$0xff] %v497
        %514 = vst [vmem:[%s4 + $0x68] sm:$0xff] %v498
        %515 = vst [vmem:[%s4 + $0x70] sm:$0xff] %v499
        %516 = vst [vmem:[%s4 + $0x78] sm:$0xff] %v500
      $region44: #{upper_module_forward.1} parent=35 // pred_fallthru
        _
      // Predicated region
      $region45: #{upper_module_forward.1} parent=35 // pred_check
        %p517 = pneg %p131
      $region46: #{upper_module_forward.1} parent=35 // pred_check_branch
        %519 = sbr.rel (%p517) target = $region48
      $region47: #{upper_module_forward.1} parent=35 // pred_region
        _
      $region48: #{upper_module_forward.1} parent=35 // pred_fallthru
        _
      // Predicated region
      $region49: #{upper_module_forward.1} parent=35 // pred_check
        %p520 = pneg %p131
      $region50: #{upper_module_forward.1} parent=35 // pred_check_branch
        %522 = sbr.rel (%p520) target = $region52
      $region51: #{upper_module_forward.1} parent=35 // pred_region
        _
      $region52: #{upper_module_forward.1} parent=35 // pred_fallthru
        _
    $region36: #{upper_module_forward.1} parent=5 // pred_fallthru
      _
    %p523 = scmp.le.s32.totalorder 2, %s10
    // Predicated region
    $region53: #{upper_module_forward.1} parent=5 // pred_check
      %p524 = pneg %p523
    $region54: #{upper_module_forward.1} parent=5 // pred_check_branch
      %526 = sbr.rel (%p524) target = $region56
    $region55: #{upper_module_forward.1} parent=5 // pred_region
      %s527 = ssub.s32 %s10, 2
    $region56: #{upper_module_forward.1} parent=5 // pred_fallthru
      _
  $region6: #{upper_module_forward.1} parent=0 // loop_footer
    %s14 = sadd.s32 1, %s10
  $region7: #{upper_module_forward.1} parent=0 // loop_footer_branch
    %9 = sbr.rel target = $region3
  $region8: #{upper_module_forward.1} parent=0 // loop_exit
    _

</llo_original>
